<compile_context>
chip_gen: v5e
topology: v5e:2x2
jax: 0.10.0
libtpu: 0.0.40
codegen_flags: <defaults>
</compile_context>

<pallas_src>
import functools

import jax
import jax.numpy as jnp
from jax.experimental import pallas as pl
from jax.experimental.pallas import tpu as pltpu


_TB_DEFAULT = 2048  # batch-tile (lanes); large enough to amortize per-step overhead


# ----------------------------- kernels ------------------------------------


def _mlp_tile(v_ref, w1_ref, b1_ref, w2_ref, b2_ref, w3_ref, b3_ref):
    """Shared MLP body on one (5, TB) tile. Returns (1, TB) f32."""
    x = v_ref[...]                                                      # (5, TB)
    h1 = jnp.tanh(
        jnp.dot(w1_ref[...], x, preferred_element_type=jnp.float32) + b1_ref[...]
    )                                                                   # (16, TB)
    h2 = jnp.tanh(
        jnp.dot(w2_ref[...], h1, preferred_element_type=jnp.float32) + b2_ref[...]
    )                                                                   # (16, TB)
    dv = jnp.dot(w3_ref[...], h2, preferred_element_type=jnp.float32) + b3_ref[...]
    return dv                                                           # (1, TB)


def forward_kernel(v_ref, w1_ref, b1_ref, w2_ref, b2_ref, w3_ref, b3_ref, out_ref):
    dv = _mlp_tile(v_ref, w1_ref, b1_ref, w2_ref, b2_ref, w3_ref, b3_ref)
    out_ref[...] = dv.astype(out_ref.dtype)


def predict_kernel(u_ref, v_ref, w1_ref, b1_ref, w2_ref, b2_ref, w3_ref, b3_ref,
                   out_ref):
    dv = _mlp_tile(v_ref, w1_ref, b1_ref, w2_ref, b2_ref, w3_ref, b3_ref)
    out_ref[...] = (u_ref[...] + dv).astype(out_ref.dtype)   # fused predict epilogue


# ----------------------------- wrappers ------------------------------------


def _round_up(x, m):
    return pl.cdiv(x, m) * m


def _batch_tiling(B):
    """Pick batch tile TB (multiple of 128) and padded batch Bp (multiple of TB)."""
    b128 = _round_up(max(B, 1), 128)
    tb = min(_TB_DEFAULT, b128)
    bp = _round_up(B, tb)
    return tb, bp


def _pad_lanes(x, bp):
    """Pad the last (lane/batch) axis of a 2-D array up to bp columns."""
    pad = bp - x.shape[-1]
    if pad == 0:
        return x
    return jnp.pad(x, ((0, 0), (0, pad)))


def _param_args(params):
    return (params["w1"], params["b1"], params["w2"], params["b2"],
            params["w3"], params["b3"])


def _const_spec(shape):
    # Parameters: one full block, constant index_map -> stays resident in VMEM.
    return pl.BlockSpec(shape, lambda i: (0, 0))


_COMPILER_PARAMS = pltpu.CompilerParams(dimension_semantics=("parallel",))


@functools.partial(jax.jit, static_argnames=())
def approximator_forward(v, params):
    """v: (B, 5). Returns dv: (B, 1) float32.  Matches Approximator.forward."""
    B = v.shape[0]
    tb, bp = _batch_tiling(B)

    v_t = _pad_lanes(v.astype(jnp.float32).T, bp)            # (5, Bp), batch on lanes
    p_args = _param_args(params)

    out = pl.pallas_call(
        forward_kernel,
        out_shape=jax.ShapeDtypeStruct((1, bp), jnp.float32),
        grid=(bp // tb,),
        in_specs=[pl.BlockSpec((5, tb), lambda i: (0, i))]
        + [_const_spec(p.shape) for p in p_args],
        out_specs=pl.BlockSpec((1, tb), lambda i: (0, i)),
        compiler_params=_COMPILER_PARAMS,
    )(v_t, *p_args)

    return out[:, :B].T                                       # (B, 1)


@functools.partial(jax.jit, static_argnames=())
def predict(u, v, params):
    """Mirror of Approximator.predict: u + forward(v), fused in one kernel."""
    B = v.shape[0]
    tb, bp = _batch_tiling(B)

    if u.ndim == 1:
        u = u[:, None]
    u_t = _pad_lanes(u.astype(jnp.float32).T, bp)             # (1, Bp)
    v_t = _pad_lanes(v.astype(jnp.float32).T, bp)             # (5, Bp)
    p_args = _param_args(params)

    out = pl.pallas_call(
        predict_kernel,
        out_shape=jax.ShapeDtypeStruct((1, bp), jnp.float32),
        grid=(bp // tb,),
        in_specs=[pl.BlockSpec((1, tb), lambda i: (0, i)),
                  pl.BlockSpec((5, tb), lambda i: (0, i))]
        + [_const_spec(p.shape) for p in p_args],
        out_specs=pl.BlockSpec((1, tb), lambda i: (0, i)),
        compiler_params=_COMPILER_PARAMS,
    )(u_t, v_t, *p_args)

    return out[:, :B].T                                       # (B, 1)


# ----------------------------- params --------------------------------------


def init_params(key):
    """Deterministic init mimicking torch nn.Linear: W (out,in), b (out,1)."""
    ks = jax.random.split(key, 6)

    def uniform(k, shape, fan_in):
        bound = 1.0 / jnp.sqrt(float(fan_in))
        return jax.random.uniform(k, shape, jnp.float32, -bound, bound)

    return {
        "w1": uniform(ks[0], (16, 5), 5),
        "b1": uniform(ks[1], (16, 1), 5),
        "w2": uniform(ks[2], (16, 16), 16),
        "b2": uniform(ks[3], (16, 1), 16),
        "w3": uniform(ks[4], (1, 16), 16),
        "b3": uniform(ks[5], (1, 1), 16),
    }


# ----------------------------- main ----------------------------------------


if __name__ == "__main__":
    key = jax.random.PRNGKey(0)
    k_params, k_v, k_u = jax.random.split(key, 3)

    params = init_params(k_params)

    B = 8
    v = jax.random.normal(k_v, (B, 5), jnp.float32)
    u = jax.random.normal(k_u, (B,), jnp.float32)

    # forward()
    dv = approximator_forward(v, params)
    jax.block_until_ready(dv)

    # Pure-JAX reference (torch semantics: y = x @ W.T + b).
    ref = jnp.tanh(v @ params["w1"].T + params["b1"].T)
    ref = jnp.tanh(ref @ params["w2"].T + params["b2"].T)
    ref = ref @ params["w3"].T + params["b3"].T
    assert dv.shape == (B, 1)
    assert jnp.allclose(dv, ref, atol=1e-5), "forward mismatch vs reference"

    # predict() (fused u + dv kernel)
    out = predict(u, v, params)
    jax.block_until_ready(out)
    ref_pred = u[:, None] + ref
    assert out.shape == (B, 1)
    assert jnp.allclose(out, ref_pred, atol=1e-5), "predict mismatch vs reference"

    print("KERNEL_OK")
</pallas_src>

<mosaic_0001>
module attributes {stable_mosaic.version = 11 : i64} {
  func.func @forward_kernel(%arg0: i32, %arg1: memref<5x128xf32, #tpu.memory_space<vmem>>, %arg2: memref<16x5xf32, #tpu.memory_space<vmem>>, %arg3: memref<16x1xf32, #tpu.memory_space<vmem>>, %arg4: memref<16x16xf32, #tpu.memory_space<vmem>>, %arg5: memref<16x1xf32, #tpu.memory_space<vmem>>, %arg6: memref<1x16xf32, #tpu.memory_space<vmem>>, %arg7: memref<1x1xf32, #tpu.memory_space<vmem>>, %arg8: memref<1x128xf32, #tpu.memory_space<vmem>>) attributes {dimension_semantics = [#tpu.dimension_semantics<parallel>], iteration_bounds = array<i64: 1>, scalar_prefetch = 0 : i64, scratch_operands = 0 : i64, tpu.core_type = #tpu.core_type<tc>, window_params = [{transform_indices = @transform_0, window_bounds = array<i64: 5, 128>}, {pipeline_mode = #tpu.pipeline_mode<synchronous>, transform_indices = @transform_1, window_bounds = array<i64: 16, 5>}, {pipeline_mode = #tpu.pipeline_mode<synchronous>, transform_indices = @transform_2, window_bounds = array<i64: 16, 1>}, {pipeline_mode = #tpu.pipeline_mode<synchronous>, transform_indices = @transform_3, window_bounds = array<i64: 16, 16>}, {pipeline_mode = #tpu.pipeline_mode<synchronous>, transform_indices = @transform_4, window_bounds = array<i64: 16, 1>}, {pipeline_mode = #tpu.pipeline_mode<synchronous>, transform_indices = @transform_5, window_bounds = array<i64: 1, 16>}, {pipeline_mode = #tpu.pipeline_mode<synchronous>, transform_indices = @transform_6, window_bounds = array<i64: 1, 1>}, {transform_indices = @transform_7, window_bounds = array<i64: 1, 128>}]} {
    %c0 = arith.constant 0 : index
    %c0_0 = arith.constant 0 : index
    %0 = vector.load %arg1[%c0, %c0_0] : memref<5x128xf32, #tpu.memory_space<vmem>>, vector<5x128xf32>
    %c0_1 = arith.constant 0 : index
    %c0_2 = arith.constant 0 : index
    %1 = vector.load %arg2[%c0_1, %c0_2] : memref<16x5xf32, #tpu.memory_space<vmem>>, vector<16x5xf32>
    %cst = arith.constant dense<0.000000e+00> : vector<16x128xf32>
    %2 = tpu.matmul %1, %0, %cst {dimension_numbers = #tpu.dot_dimension_numbers<[1], [0], [0], [1], [0, 0, 1, 1], [], []>} : vector<16x5xf32>, vector<5x128xf32>, vector<16x128xf32> -> vector<16x128xf32>
    %c0_3 = arith.constant 0 : index
    %c0_4 = arith.constant 0 : index
    %3 = vector.load %arg3[%c0_3, %c0_4] : memref<16x1xf32, #tpu.memory_space<vmem>>, vector<16x1xf32>
    %4 = vector.broadcast %3 : vector<16x1xf32> to vector<16x128xf32>
    %5 = arith.addf %2, %4 : vector<16x128xf32>
    %6 = math.tanh %5 : vector<16x128xf32>
    %c0_5 = arith.constant 0 : index
    %c0_6 = arith.constant 0 : index
    %7 = vector.load %arg4[%c0_5, %c0_6] : memref<16x16xf32, #tpu.memory_space<vmem>>, vector<16x16xf32>
    %cst_7 = arith.constant dense<0.000000e+00> : vector<16x128xf32>
    %8 = tpu.matmul %7, %6, %cst_7 {dimension_numbers = #tpu.dot_dimension_numbers<[1], [0], [0], [1], [0, 0, 1, 1], [], []>} : vector<16x16xf32>, vector<16x128xf32>, vector<16x128xf32> -> vector<16x128xf32>
    %c0_8 = arith.constant 0 : index
    %c0_9 = arith.constant 0 : index
    %9 = vector.load %arg5[%c0_8, %c0_9] : memref<16x1xf32, #tpu.memory_space<vmem>>, vector<16x1xf32>
    %10 = vector.broadcast %9 : vector<16x1xf32> to vector<16x128xf32>
    %11 = arith.addf %8, %10 : vector<16x128xf32>
    %12 = math.tanh %11 : vector<16x128xf32>
    %c0_10 = arith.constant 0 : index
    %c0_11 = arith.constant 0 : index
    %13 = vector.load %arg6[%c0_10, %c0_11] : memref<1x16xf32, #tpu.memory_space<vmem>>, vector<1x16xf32>
    %cst_12 = arith.constant dense<0.000000e+00> : vector<1x128xf32>
    %14 = tpu.matmul %13, %12, %cst_12 {dimension_numbers = #tpu.dot_dimension_numbers<[1], [0], [0], [1], [0, 0, 1, 1], [], []>} : vector<1x16xf32>, vector<16x128xf32>, vector<1x128xf32> -> vector<1x128xf32>
    %c0_13 = arith.constant 0 : index
    %c0_14 = arith.constant 0 : index
    %15 = vector.load %arg7[%c0_13, %c0_14] : memref<1x1xf32, #tpu.memory_space<vmem>>, vector<1x1xf32>
    %16 = vector.broadcast %15 : vector<1x1xf32> to vector<1x128xf32>
    %17 = arith.addf %14, %16 : vector<1x128xf32>
    %c0_15 = arith.constant 0 : index
    %c0_16 = arith.constant 0 : index
    %18 = vector.load %arg8[%c0_15, %c0_16] : memref<1x128xf32, #tpu.memory_space<vmem>>, vector<1x128xf32>
    tpu.vector_store %arg8[%c0_15, %c0_16], %17 {strides = array<i32>} : memref<1x128xf32, #tpu.memory_space<vmem>>, vector<1x128xf32>,
    return
  }
  func.func @transform_0(%arg0: i32) -> (i32, i32) {
    %c0_i32 = arith.constant 0 : i32
    %c0_i32_0 = arith.constant 0 : i32
    return %c0_i32, %arg0 : i32, i32
  }
  func.func @transform_1(%arg0: i32) -> (i32, i32) {
    %c0_i32 = arith.constant 0 : i32
    %c0_i32_0 = arith.constant 0 : i32
    %c0_i32_1 = arith.constant 0 : i32
    return %c0_i32, %c0_i32_0 : i32, i32
  }
  func.func @transform_2(%arg0: i32) -> (i32, i32) {
    %c0_i32 = arith.constant 0 : i32
    %c0_i32_0 = arith.constant 0 : i32
    %c0_i32_1 = arith.constant 0 : i32
    return %c0_i32, %c0_i32_0 : i32, i32
  }
  func.func @transform_3(%arg0: i32) -> (i32, i32) {
    %c0_i32 = arith.constant 0 : i32
    %c0_i32_0 = arith.constant 0 : i32
    %c0_i32_1 = arith.constant 0 : i32
    return %c0_i32, %c0_i32_0 : i32, i32
  }
  func.func @transform_4(%arg0: i32) -> (i32, i32) {
    %c0_i32 = arith.constant 0 : i32
    %c0_i32_0 = arith.constant 0 : i32
    %c0_i32_1 = arith.constant 0 : i32
    return %c0_i32, %c0_i32_0 : i32, i32
  }
  func.func @transform_5(%arg0: i32) -> (i32, i32) {
    %c0_i32 = arith.constant 0 : i32
    %c0_i32_0 = arith.constant 0 : i32
    %c0_i32_1 = arith.constant 0 : i32
    return %c0_i32, %c0_i32_0 : i32, i32
  }
  func.func @transform_6(%arg0: i32) -> (i32, i32) {
    %c0_i32 = arith.constant 0 : i32
    %c0_i32_0 = arith.constant 0 : i32
    %c0_i32_1 = arith.constant 0 : i32
    return %c0_i32, %c0_i32_0 : i32, i32
  }
  func.func @transform_7(%arg0: i32) -> (i32, i32) {
    %c0_i32 = arith.constant 0 : i32
    %c0_i32_0 = arith.constant 0 : i32
    return %c0_i32, %arg0 : i32, i32
  }
}

</mosaic_0001>

<llo_original>
// kernel: approximator_forward.1
$region0: #{approximator_forward.1}
  #allocation0 [shape = 'u32[]', space=smem, size = 0x4, offset = 0x4, fixed_abs, tag = 'smem constant byte address 0x4 - core index']
  #allocation1 [shape = 'u32[72,128]{1,0:T(1,128)}', space=vmem, size = 0x9000, scoped, tag = 'internal scratch']
  #allocation2 [shape = 'f32[1,1]{1,0:T(1,128)S(1)}', space=vmem, size = 0x200, scoped, tag = 'scoped memory for approximator_forward.1']
  %s0 = inlined_call_operand.vmem [shape: f32[5,128], index: 0, kind: input, shape index: {}]
  %s1 = inlined_call_operand.vmem [shape: f32[16,5], index: 1, kind: input, shape index: {}]
  %s2 = inlined_call_operand.vmem [shape: f32[16,1], index: 2, kind: input, shape index: {}]
  %s3 = inlined_call_operand.vmem [shape: f32[16,16], index: 3, kind: input, shape index: {}]
  %s4 = inlined_call_operand.vmem [shape: f32[16,1], index: 4, kind: input, shape index: {}]
  %s5 = inlined_call_operand.vmem [shape: f32[1,16], index: 5, kind: input, shape index: {}]
  %s6 = inlined_call_operand.<no memory space> [shape: f32[1,1], index: 6, kind: input, shape index: {}]
  %s7 = inlined_call_operand.vmem [shape: f32[1,128], index: 7, kind: output, shape index: {}]
  %s8 = sld [smem:[#allocation0]]
  $region38: #{approximator_forward.1} parent=0
    _
  %s10 = ssub.s32 1, %s8
  %s11 = scalar_select 0, %s10, %s8
  %v12 = vstv %s6
  %13 = vst [vmem:[#allocation2] sm:$0x1] %v12
  // Predicated region
  $region2: #{approximator_forward.1} parent=0 // pred_check
    _
  $region3: #{approximator_forward.1} parent=0 // pred_check_branch
    %15 = sbr.rel (0) target = $region5
  $region4: #{approximator_forward.1} parent=0 // pred_region
    _
  $region5: #{approximator_forward.1} parent=0 // pred_fallthru
    _
  // Predicated region
  $region6: #{approximator_forward.1} parent=0 // pred_check
    _
  $region7: #{approximator_forward.1} parent=0 // pred_check_branch
    %17 = sbr.rel (0) target = $region9
  $region8: #{approximator_forward.1} parent=0 // pred_region
    _
  $region9: #{approximator_forward.1} parent=0 // pred_fallthru
    _
  // Predicated region
  $region10: #{approximator_forward.1} parent=0 // pred_check
    _
  $region11: #{approximator_forward.1} parent=0 // pred_check_branch
    %19 = sbr.rel (0) target = $region13
  $region12: #{approximator_forward.1} parent=0 // pred_region
    _
  $region13: #{approximator_forward.1} parent=0 // pred_fallthru
    _
  // Predicated region
  $region14: #{approximator_forward.1} parent=0 // pred_check
    _
  $region15: #{approximator_forward.1} parent=0 // pred_check_branch
    %21 = sbr.rel (0) target = $region17
  $region16: #{approximator_forward.1} parent=0 // pred_region
    _
  $region17: #{approximator_forward.1} parent=0 // pred_fallthru
    _
  // Predicated region
  $region18: #{approximator_forward.1} parent=0 // pred_check
    _
  $region19: #{approximator_forward.1} parent=0 // pred_check_branch
    %23 = sbr.rel (0) target = $region21
  $region20: #{approximator_forward.1} parent=0 // pred_region
    _
  $region21: #{approximator_forward.1} parent=0 // pred_fallthru
    _
  // Predicated region
  $region22: #{approximator_forward.1} parent=0 // pred_check
    _
  $region23: #{approximator_forward.1} parent=0 // pred_check_branch
    %25 = sbr.rel (0) target = $region25
  $region24: #{approximator_forward.1} parent=0 // pred_region
    _
  $region25: #{approximator_forward.1} parent=0 // pred_fallthru
    _
  // Predicated region
  $region26: #{approximator_forward.1} parent=0 // pred_check
    _
  $region27: #{approximator_forward.1} parent=0 // pred_check_branch
    %27 = sbr.rel (0) target = $region29
  $region28: #{approximator_forward.1} parent=0 // pred_region
    _
  $region29: #{approximator_forward.1} parent=0 // pred_fallthru
    _
  %v28 = vld [vmem:[%s0] sm:$0x1f]
  %v29 = vld [vmem:[%s1] sm:$0xff]
  %v30 = vld [vmem:[%s1 + $0x8] sm:$0xff]
  %v31 = vld [vmem:[%s2] sm:$0xff]
  %v32 = vld [vmem:[%s2 + $0x8] sm:$0xff]
  %34 = vset.pattern.permute.xlu0 0
  %35 = vperm.xlu0 %34, %v31
  %v36 = vpop.permute.xlu0 %35
  %39 = vset.pattern.permute.xlu0 0
  %40 = vperm.xlu0 %39, %v32
  %v41 = vpop.permute.xlu0 %40
  %vm43 = vcmask 39936
  %v45 = vsel %vm43, %v29, 0
  %v48 = vsel %vm43, %v30, 0
  %vm50 = vcmask 1044480
  %v52 = vsel %vm50, %v28, 0
  %54 = vmatpush.msra.mxu0 0.0
  %55 = vmatpush.msra.mxu0 0.0
  %56 = vmatpush.msra.mxu0 0.0
  %57 = vmatpush.msra.mxu0 0.0
  %58 = vmatpush.msra.mxu0 0.0
  %59 = vmatpush.msra.mxu0 0.0
  %60 = vmatpush.msra.mxu0 0.0
  %61 = vmatpush.msra.mxu0 0.0
  %62 = vmatpush.msra.mxu0 0.0
  %63 = vmatpush.msra.mxu0 0.0
  %64 = vmatpush.msra.mxu0 0.0
  %65 = vmatpush.msra.mxu0 0.0
  %66 = vmatpush.msra.mxu0 0.0
  %67 = vmatpush.msra.mxu0 0.0
  %68 = vmatpush.msra.mxu0 0.0
  %69 = vmatpush.msra.mxu0 %v52
  %70 = vmatmul.f32.gmra.mxu0 %v45
  %v71 = vpop.f32.mrf.mxu0
  %v72 = vadd.f32 %v36, %v71
  %73 = vmatmul.f32.gmra.mxu0 %v48
  %v74 = vpop.f32.mrf.mxu0
  %v75 = vadd.f32 %v41, %v74
  %76 = vdwg.mxu0
  %v77 = vtanh.pop %v72
  %v78 = vtanh.pop %v75
  %v79 = vld [vmem:[%s3] sm:$0xff]
  %v80 = vld [vmem:[%s3 + $0x8] sm:$0xff]
  %v81 = vld [vmem:[%s4] sm:$0xff]
  %v82 = vld [vmem:[%s4 + $0x8] sm:$0xff]
  %84 = vset.pattern.permute.xlu0 0
  %85 = vperm.xlu0 %84, %v81
  %v86 = vpop.permute.xlu0 %85
  %89 = vset.pattern.permute.xlu0 0
  %90 = vperm.xlu0 %89, %v82
  %v91 = vpop.permute.xlu0 %90
  %vm93 = vcmask 130048
  %v95 = vsel %vm93, %v79, 0
  %v98 = vsel %vm93, %v80, 0
  %100 = vmatpush.msra.mxu0 0.0
  %101 = vmatpush.msra.mxu0 0.0
  %102 = vmatpush.msra.mxu0 0.0
  %103 = vmatpush.msra.mxu0 0.0
  %104 = vmatpush.msra.mxu0 0.0
  %105 = vmatpush.msra.mxu0 0.0
  %106 = vmatpush.msra.mxu0 0.0
  %107 = vmatpush.msra.mxu0 0.0
  %108 = vmatpush.msra.mxu0 0.0
  %109 = vmatpush.msra.mxu0 0.0
  %110 = vmatpush.msra.mxu0 0.0
  %111 = vmatpush.msra.mxu0 0.0
  %112 = vmatpush.msra.mxu0 0.0
  %113 = vmatpush.msra.mxu0 0.0
  %114 = vmatpush.msra.mxu0 %v78
  %115 = vmatpush.msra.mxu0 %v77
  %116 = vmatmul.f32.gmra.mxu0 %v95
  %v117 = vpop.f32.mrf.mxu0
  %v118 = vadd.f32 %v86, %v117
  %119 = vmatmul.f32.gmra.mxu0 %v98
  %v120 = vpop.f32.mrf.mxu0
  %v121 = vadd.f32 %v91, %v120
  %122 = vdwg.mxu0
  %v123 = vtanh.pop %v118
  %v124 = vtanh.pop %v121
  %v125 = vld [vmem:[%s5] sm:$0x1]
  %v126 = vld [vmem:[#allocation2] sm:$0x1]
  %128 = vset.pattern.permute.xlu0 0
  %129 = vperm.xlu0 %128, %v126
  %v130 = vpop.permute.xlu0 %129
  %v132 = vperm.slane %v130, 0
  %v134 = vsel %vm93, %v125, 0
  %136 = vmatpush.msra.mxu0 0.0
  %137 = vmatpush.msra.mxu0 0.0
  %138 = vmatpush.msra.mxu0 0.0
  %139 = vmatpush.msra.mxu0 0.0
  %140 = vmatpush.msra.mxu0 0.0
  %141 = vmatpush.msra.mxu0 0.0
  %142 = vmatpush.msra.mxu0 0.0
  %143 = vmatpush.msra.mxu0 0.0
  %144 = vmatpush.msra.mxu0 0.0
  %145 = vmatpush.msra.mxu0 0.0
  %146 = vmatpush.msra.mxu0 0.0
  %147 = vmatpush.msra.mxu0 0.0
  %148 = vmatpush.msra.mxu0 0.0
  %149 = vmatpush.msra.mxu0 0.0
  %150 = vmatpush.msra.mxu0 %v124
  %151 = vmatpush.msra.mxu0 %v123
  %152 = vmatmul.f32.gmra.mxu0 %v134
  %v153 = vpop.f32.mrf.mxu0
  %v154 = vadd.f32 %v132, %v153
  %155 = vdwg.mxu0
  %156 = vst [vmem:[%s7] sm:$0x1] %v154
  // Predicated region
  $region30: #{approximator_forward.1} parent=0 // pred_check
    _
  $region31: #{approximator_forward.1} parent=0 // pred_check_branch
    %158 = sbr.rel (0) target = $region33
  $region32: #{approximator_forward.1} parent=0 // pred_region
    _
  $region33: #{approximator_forward.1} parent=0 // pred_fallthru
    _
  // Predicated region
  $region34: #{approximator_forward.1} parent=0 // pred_check
    _
  $region35: #{approximator_forward.1} parent=0 // pred_check_branch
    %160 = sbr.rel (0) target = $region37
  $region36: #{approximator_forward.1} parent=0 // pred_region
    _
  $region37: #{approximator_forward.1} parent=0 // pred_fallthru
    _

</llo_original>
